<compile_context>
chip_gen: v7x
topology: tpu7x:2x2x1
jax: 0.10.0
libtpu: 0.0.40
codegen_flags: <defaults>
</compile_context>

<pallas_src>
import functools

import jax
import jax.numpy as jnp
import numpy as np
from jax import lax
from jax.experimental import pallas as pl
from jax.experimental.pallas import tpu as pltpu


def contrastive_kernel(ntcrops, batch_size, scale, wb_ref, q_ref, s_ref, out_ref):
    B = batch_size
    wp = wb_ref[0]                                 # w / temperature  (SMEM scalar)
    bp = wb_ref[1]                                 # b / temperature
    # Note: torch.clamp(self.w, 1e-6) in the reference discards its result -> no-op.

    q = q_ref[...]                                 # (ntcrops*B, Dp) pre-normalized teacher
    s = s_ref[...]                                 # (ntcrops*B, Dp) pre-normalized student

    def gram(x, y):                                # ((x @ y^T) * w + b) / T, f32 MXU acc
        g = lax.dot_general(x, y, (((1,), (1,)), ((), ())),
                            preferred_element_type=jnp.float32)
        return g * wp + bp

    # One fat cross matmul: every pair's l_qs block at once (MXU M = N = ntcrops*B).
    l_qs = gram(q, s)                              # (ntcrops*B, ntcrops*B)
    # Per-crop self-Grams, each computed exactly once for the whole forward.
    l_qq = [gram(q[c * B:(c + 1) * B], q[c * B:(c + 1) * B]) for c in range(ntcrops)]
    l_ss = [gram(s[c * B:(c + 1) * B], s[c * B:(c + 1) * B]) for c in range(ntcrops)]

    # logits_mask (diagonal removal), built once from iota compares, shared by all pairs.
    rr = lax.broadcasted_iota(jnp.int32, (B, B), 0)
    cc = lax.broadcasted_iota(jnp.int32, (B, B), 1)
    offdiag = rr != cc

    def fullsum(x):                                # -> (1, 1)
        return jnp.sum(jnp.sum(x, axis=1, keepdims=True), axis=0, keepdims=True)

    total = jnp.zeros((1, 1), jnp.float32)
    # Static unroll over the ntcrops*(ntcrops-1) off-diagonal (iq, v) pairs.
    for iq in range(ntcrops):
        qf = q[iq * B:(iq + 1) * B].astype(jnp.float32)
        qq = l_qq[iq]
        for v in range(ntcrops):
            if v == iq:
                continue
            sf = s[v * B:(v + 1) * B].astype(jnp.float32)
            qs = l_qs[iq * B:(iq + 1) * B, v * B:(v + 1) * B]   # (B, B) cross block
            ss = l_ss[v]

            # Positive logits = block diagonal of qs.  Both halves of the 2B rows share the
            # same positive and sum(pmask, axis=1) == 1 for nviews == 2, so only the scalar
            # 2*sum(diag) is needed; computed directly from the features (no (B,B) select).
            pos = 2.0 * (wp * fullsum(qf * sf) + float(B) * bp)

            # Teacher-half rows (0..B-1): full row is [qq | qs], (B, 1) orientation.
            m_q = jnp.maximum(jnp.max(qq, axis=1, keepdims=True),
                              jnp.max(qs, axis=1, keepdims=True))
            den_q = (jnp.sum(jnp.where(offdiag, jnp.exp(qq - m_q), 0.0),
                             axis=1, keepdims=True)
                     + jnp.sum(jnp.exp(qs - m_q), axis=1, keepdims=True))

            # Student-half rows (B..2B-1): full row is [qs^T | ss]; the similarity matrix
            # is symmetric, so axis-0 reductions of qs / ss stand in for the row
            # reductions, in (1, B) orientation.
            m_s = jnp.maximum(jnp.max(qs, axis=0, keepdims=True),
                              jnp.max(ss, axis=0, keepdims=True))
            den_s = (jnp.sum(jnp.exp(qs - m_s), axis=0, keepdims=True)
                     + jnp.sum(jnp.where(offdiag, jnp.exp(ss - m_s), 0.0),
                               axis=0, keepdims=True))

            pair = (pos
                    - fullsum(m_q + jnp.log(den_q))
                    - fullsum(m_s + jnp.log(den_s)))
            total = total + pair

    out_ref[...] = jnp.broadcast_to(scale * total, out_ref.shape).astype(jnp.float32)


def contrastive_loss(student_output, teacher_output, w, b, *, ncrops, ntcrops,
                     batch_size, temperature=1.0, base_temperature=0.07,
                     compute_dtype=jnp.bfloat16):
    del ncrops  # unused by forward(), kept for signature fidelity
    if ntcrops < 2:
        raise ValueError("ContrastiveLoss needs ntcrops >= 2 (n_loss_terms would be 0).")
    B = batch_size
    D = student_output.shape[-1]
    Dp = ((D + 127) // 128) * 128                  # lane-dense K; zero-pad is inert
    n_loss_terms = ntcrops * (ntcrops - 1)

    teacher_output = lax.stop_gradient(teacher_output)   # .detach() in the reference

    # Per-row cosine normalization hoisted out of the kernel (done exactly once per row),
    # eps matching the reference's f / max(||f||, 1e-8); then cast to the MXU operand dtype.
    def normalize(x):
        nrm = jnp.sqrt(jnp.sum(jnp.square(x), axis=-1, keepdims=True))
        return x / jnp.maximum(nrm, 1e-8)

    q = normalize(teacher_output.astype(jnp.float32)).astype(compute_dtype)
    s = normalize(student_output.astype(jnp.float32)).astype(compute_dtype)
    if Dp != D:
        q = jnp.pad(q, ((0, 0), (0, Dp - D)))
        s = jnp.pad(s, ((0, 0), (0, Dp - D)))

    inv_t = 1.0 / float(temperature)
    wb = jnp.stack([jnp.asarray(w, jnp.float32) * inv_t,      # w' = w / T
                    jnp.asarray(b, jnp.float32) * inv_t])     # b' = b / T

    # Folds: per-row mean over 2B rows, -(T / base_T), sum(pmask, axis=1) == 1 (nviews==2),
    # and the final division by n_loss_terms.
    scale = -(float(temperature) / float(base_temperature)) / (2.0 * B * n_loss_terms)

    kernel = functools.partial(contrastive_kernel, ntcrops, B, scale)

    out = pl.pallas_call(
        kernel,
        out_shape=jax.ShapeDtypeStruct((1, 128), jnp.float32),
        in_specs=[
            pl.BlockSpec(memory_space=pltpu.MemorySpace.SMEM),   # [w/T, b/T]
            pl.BlockSpec(memory_space=pltpu.MemorySpace.VMEM),   # teacher stack
            pl.BlockSpec(memory_space=pltpu.MemorySpace.VMEM),   # student stack
        ],
        out_specs=pl.BlockSpec(memory_space=pltpu.MemorySpace.VMEM),
    )(wb, q, s)

    return out[0, 0]


def reference_loss(student_output, teacher_output, w, b, *, ntcrops, batch_size,
                   temperature=1.0, base_temperature=0.07, compute_dtype=jnp.float32):
    """Pure-JAX reference mirroring the PyTorch module (optionally bf16-rounded features)."""
    nviews = 2
    B = batch_size
    n = nviews * B
    D = student_output.shape[-1]
    lmask = 1.0 - jnp.eye(n, dtype=jnp.float32)
    pmask = jnp.tile(jnp.eye(B, dtype=jnp.float32), (nviews, nviews)) * lmask
    t_chunks = teacher_output.reshape(ntcrops, B, D)
    s_chunks = student_output.reshape(ntcrops, B, D)
    total, cnt = 0.0, 0
    for iq in range(ntcrops):
        for v in range(ntcrops):
            if v == iq:
                continue
            f = jnp.concatenate([t_chunks[iq], s_chunks[v]], axis=0)
            fn = f / jnp.maximum(jnp.linalg.norm(f, axis=1, keepdims=True), 1e-8)
            fn = fn.astype(compute_dtype).astype(jnp.float32)
            sim = fn @ fn.T
            logits = (sim * w + b) / temperature
            logits = logits - jnp.max(logits, axis=1, keepdims=True)
            exp_l = jnp.exp(logits) * lmask
            log_prob = logits - jnp.log(jnp.sum(exp_l, axis=1, keepdims=True))
            lp = jnp.sum(pmask * log_prob, axis=1) / jnp.sum(pmask, axis=1)
            total = total + (-(temperature / base_temperature) * jnp.mean(lp))
            cnt += 1
    return total / cnt


if __name__ == "__main__":
    ntcrops = 2
    ncrops = 2
    batch_size = 8
    D = 32
    init_w, init_b = 10.0, -5.0

    key = jax.random.PRNGKey(0)
    k1, k2 = jax.random.split(key)
    student_output = jax.random.normal(k1, (ntcrops * batch_size, D), jnp.float32)
    teacher_output = jax.random.normal(k2, (ntcrops * batch_size, D), jnp.float32)

    # Default path: bf16 MXU operands, compared against a reference that applies the same
    # bf16 rounding to the normalized features.
    out_bf16 = contrastive_loss(student_output, teacher_output, init_w, init_b,
                                ncrops=ncrops, ntcrops=ntcrops, batch_size=batch_size)
    out_bf16 = jax.block_until_ready(out_bf16)
    ref_bf16 = jax.block_until_ready(
        reference_loss(student_output, teacher_output, init_w, init_b,
                       ntcrops=ntcrops, batch_size=batch_size,
                       compute_dtype=jnp.bfloat16))
    np.testing.assert_allclose(np.asarray(out_bf16), np.asarray(ref_bf16),
                               rtol=2e-3, atol=2e-3)

    # f32 path: matches the module's full-precision math at tight tolerance.
    out_f32 = contrastive_loss(student_output, teacher_output, init_w, init_b,
                               ncrops=ncrops, ntcrops=ntcrops, batch_size=batch_size,
                               compute_dtype=jnp.float32)
    out_f32 = jax.block_until_ready(out_f32)
    ref_f32 = jax.block_until_ready(
        reference_loss(student_output, teacher_output, init_w, init_b,
                       ntcrops=ntcrops, batch_size=batch_size))
    np.testing.assert_allclose(np.asarray(out_f32), np.asarray(ref_f32),
                               rtol=5e-4, atol=5e-4)

    print("KERNEL_OK")
</pallas_src>

<mosaic_0001>
module attributes {stable_mosaic.version = 11 : i64} {
  func.func @contrastive_kernel(%arg0: memref<2xf32, #tpu.memory_space<smem>>, %arg1: memref<16x128xbf16, #tpu.memory_space<vmem>>, %arg2: memref<16x128xbf16, #tpu.memory_space<vmem>>, %arg3: memref<1x128xf32, #tpu.memory_space<vmem>>) attributes {dimension_semantics = [], scalar_prefetch = 0 : i64, scratch_operands = 0 : i64, tpu.core_type = #tpu.core_type<tc>} {
    %c0 = arith.constant 0 : index
    %0 = memref.load %arg0[%c0] : memref<2xf32, #tpu.memory_space<smem>>
    %c1 = arith.constant 1 : index
    %1 = memref.load %arg0[%c1] : memref<2xf32, #tpu.memory_space<smem>>
    %c0_0 = arith.constant 0 : index
    %c0_1 = arith.constant 0 : index
    %2 = vector.load %arg1[%c0_0, %c0_1] : memref<16x128xbf16, #tpu.memory_space<vmem>>, vector<16x128xbf16>
    %c0_2 = arith.constant 0 : index
    %c0_3 = arith.constant 0 : index
    %3 = vector.load %arg2[%c0_2, %c0_3] : memref<16x128xbf16, #tpu.memory_space<vmem>>, vector<16x128xbf16>
    %cst = arith.constant dense<0.000000e+00> : vector<16x16xf32>
    %4 = tpu.matmul %2, %3, %cst {dimension_numbers = #tpu.dot_dimension_numbers<[1], [1], [0], [0], [0, 0, 1, 0], [], []>} : vector<16x128xbf16>, vector<16x128xbf16>, vector<16x16xf32> -> vector<16x16xf32>
    %5 = vector.broadcast %0 : f32 to vector<16x16xf32>
    %6 = arith.mulf %4, %5 : vector<16x16xf32>
    %7 = vector.broadcast %1 : f32 to vector<16x16xf32>
    %8 = arith.addf %6, %7 : vector<16x16xf32>
    %9 = vector.extract_strided_slice %2 {offsets = [0, 0], sizes = [8, 128], strides = [1, 1]} : vector<16x128xbf16> to vector<8x128xbf16>
    %10 = vector.extract_strided_slice %2 {offsets = [0, 0], sizes = [8, 128], strides = [1, 1]} : vector<16x128xbf16> to vector<8x128xbf16>
    %cst_4 = arith.constant dense<0.000000e+00> : vector<8x8xf32>
    %11 = tpu.matmul %9, %10, %cst_4 {dimension_numbers = #tpu.dot_dimension_numbers<[1], [1], [0], [0], [0, 0, 1, 0], [], []>} : vector<8x128xbf16>, vector<8x128xbf16>, vector<8x8xf32> -> vector<8x8xf32>
    %12 = vector.broadcast %0 : f32 to vector<8x8xf32>
    %13 = arith.mulf %11, %12 : vector<8x8xf32>
    %14 = vector.broadcast %1 : f32 to vector<8x8xf32>
    %15 = arith.addf %13, %14 : vector<8x8xf32>
    %16 = vector.extract_strided_slice %2 {offsets = [8, 0], sizes = [8, 128], strides = [1, 1]} : vector<16x128xbf16> to vector<8x128xbf16>
    %17 = vector.extract_strided_slice %2 {offsets = [8, 0], sizes = [8, 128], strides = [1, 1]} : vector<16x128xbf16> to vector<8x128xbf16>
    %cst_5 = arith.constant dense<0.000000e+00> : vector<8x8xf32>
    %18 = tpu.matmul %16, %17, %cst_5 {dimension_numbers = #tpu.dot_dimension_numbers<[1], [1], [0], [0], [0, 0, 1, 0], [], []>} : vector<8x128xbf16>, vector<8x128xbf16>, vector<8x8xf32> -> vector<8x8xf32>
    %19 = vector.broadcast %0 : f32 to vector<8x8xf32>
    %20 = arith.mulf %18, %19 : vector<8x8xf32>
    %21 = vector.broadcast %1 : f32 to vector<8x8xf32>
    %22 = arith.addf %20, %21 : vector<8x8xf32>
    %23 = vector.extract_strided_slice %3 {offsets = [0, 0], sizes = [8, 128], strides = [1, 1]} : vector<16x128xbf16> to vector<8x128xbf16>
    %24 = vector.extract_strided_slice %3 {offsets = [0, 0], sizes = [8, 128], strides = [1, 1]} : vector<16x128xbf16> to vector<8x128xbf16>
    %cst_6 = arith.constant dense<0.000000e+00> : vector<8x8xf32>
    %25 = tpu.matmul %23, %24, %cst_6 {dimension_numbers = #tpu.dot_dimension_numbers<[1], [1], [0], [0], [0, 0, 1, 0], [], []>} : vector<8x128xbf16>, vector<8x128xbf16>, vector<8x8xf32> -> vector<8x8xf32>
    %26 = vector.broadcast %0 : f32 to vector<8x8xf32>
    %27 = arith.mulf %25, %26 : vector<8x8xf32>
    %28 = vector.broadcast %1 : f32 to vector<8x8xf32>
    %29 = arith.addf %27, %28 : vector<8x8xf32>
    %30 = vector.extract_strided_slice %3 {offsets = [8, 0], sizes = [8, 128], strides = [1, 1]} : vector<16x128xbf16> to vector<8x128xbf16>
    %31 = vector.extract_strided_slice %3 {offsets = [8, 0], sizes = [8, 128], strides = [1, 1]} : vector<16x128xbf16> to vector<8x128xbf16>
    %cst_7 = arith.constant dense<0.000000e+00> : vector<8x8xf32>
    %32 = tpu.matmul %30, %31, %cst_7 {dimension_numbers = #tpu.dot_dimension_numbers<[1], [1], [0], [0], [0, 0, 1, 0], [], []>} : vector<8x128xbf16>, vector<8x128xbf16>, vector<8x8xf32> -> vector<8x8xf32>
    %33 = vector.broadcast %0 : f32 to vector<8x8xf32>
    %34 = arith.mulf %32, %33 : vector<8x8xf32>
    %35 = vector.broadcast %1 : f32 to vector<8x8xf32>
    %36 = arith.addf %34, %35 : vector<8x8xf32>
    %37 = tpu.iota {dimensions = array<i32: 0>} : vector<8x8xi32>
    %38 = tpu.iota {dimensions = array<i32: 1>} : vector<8x8xi32>
    %39 = arith.cmpi ne, %37, %38 : vector<8x8xi32>
    %cst_8 = arith.constant 0.000000e+00 : f32
    %40 = vector.broadcast %cst_8 : f32 to vector<1x1xf32>
    %41 = vector.extract_strided_slice %2 {offsets = [0, 0], sizes = [8, 128], strides = [1, 1]} : vector<16x128xbf16> to vector<8x128xbf16>
    %42 = arith.extf %41 : vector<8x128xbf16> to vector<8x128xf32>
    %43 = vector.extract_strided_slice %3 {offsets = [8, 0], sizes = [8, 128], strides = [1, 1]} : vector<16x128xbf16> to vector<8x128xbf16>
    %44 = arith.extf %43 : vector<8x128xbf16> to vector<8x128xf32>
    %45 = vector.extract_strided_slice %8 {offsets = [0, 8], sizes = [8, 8], strides = [1, 1]} : vector<16x16xf32> to vector<8x8xf32>
    %46 = arith.mulf %42, %44 : vector<8x128xf32>
    %cst_9 = arith.constant dense<0.000000e+00> : vector<8xf32>
    %47 = vector.multi_reduction <add>, %46, %cst_9 [1] : vector<8x128xf32> to vector<8xf32>
    %48 = vector.shape_cast %47 : vector<8xf32> to vector<8x1xf32>
    %cst_10 = arith.constant dense<0.000000e+00> : vector<1xf32>
    %49 = vector.multi_reduction <add>, %48, %cst_10 [0] : vector<8x1xf32> to vector<1xf32>
    %50 = vector.shape_cast %49 : vector<1xf32> to vector<1x1xf32>
    %51 = vector.broadcast %0 : f32 to vector<1x1xf32>
    %52 = arith.mulf %51, %50 : vector<1x1xf32>
    %cst_11 = arith.constant 8.000000e+00 : f32
    %53 = arith.mulf %cst_11, %1 : f32
    %54 = vector.broadcast %53 : f32 to vector<1x1xf32>
    %55 = arith.addf %52, %54 : vector<1x1xf32>
    %cst_12 = arith.constant 2.000000e+00 : f32
    %56 = vector.broadcast %cst_12 : f32 to vector<1x1xf32>
    %57 = arith.mulf %56, %55 : vector<1x1xf32>
    %cst_13 = arith.constant dense<0xFF800000> : vector<8xf32>
    %58 = vector.multi_reduction <maximumf>, %15, %cst_13 [1] : vector<8x8xf32> to vector<8xf32>
    %59 = vector.shape_cast %58 : vector<8xf32> to vector<8x1xf32>
    %cst_14 = arith.constant dense<0xFF800000> : vector<8xf32>
    %60 = vector.multi_reduction <maximumf>, %45, %cst_14 [1] : vector<8x8xf32> to vector<8xf32>
    %61 = vector.shape_cast %60 : vector<8xf32> to vector<8x1xf32>
    %62 = arith.maximumf %59, %61 : vector<8x1xf32>
    %63 = vector.broadcast %62 : vector<8x1xf32> to vector<8x8xf32>
    %64 = arith.subf %15, %63 : vector<8x8xf32>
    %65 = math.exp %64 : vector<8x8xf32>
    %cst_15 = arith.constant 0.000000e+00 : f32
    %66 = vector.broadcast %cst_15 : f32 to vector<8x8xf32>
    %67 = arith.select %39, %65, %66 : vector<8x8xi1>, vector<8x8xf32>
    %cst_16 = arith.constant dense<0.000000e+00> : vector<8xf32>
    %68 = vector.multi_reduction <add>, %67, %cst_16 [1] : vector<8x8xf32> to vector<8xf32>
    %69 = vector.shape_cast %68 : vector<8xf32> to vector<8x1xf32>
    %70 = vector.broadcast %62 : vector<8x1xf32> to vector<8x8xf32>
    %71 = arith.subf %45, %70 : vector<8x8xf32>
    %72 = math.exp %71 : vector<8x8xf32>
    %cst_17 = arith.constant dense<0.000000e+00> : vector<8xf32>
    %73 = vector.multi_reduction <add>, %72, %cst_17 [1] : vector<8x8xf32> to vector<8xf32>
    %74 = vector.shape_cast %73 : vector<8xf32> to vector<8x1xf32>
    %75 = arith.addf %69, %74 : vector<8x1xf32>
    %cst_18 = arith.constant dense<0xFF800000> : vector<8xf32>
    %76 = vector.multi_reduction <maximumf>, %45, %cst_18 [0] : vector<8x8xf32> to vector<8xf32>
    %77 = vector.shape_cast %76 : vector<8xf32> to vector<1x8xf32>
    %cst_19 = arith.constant dense<0xFF800000> : vector<8xf32>
    %78 = vector.multi_reduction <maximumf>, %36, %cst_19 [0] : vector<8x8xf32> to vector<8xf32>
    %79 = vector.shape_cast %78 : vector<8xf32> to vector<1x8xf32>
    %80 = arith.maximumf %77, %79 : vector<1x8xf32>
    %81 = vector.broadcast %80 : vector<1x8xf32> to vector<8x8xf32>
    %82 = arith.subf %45, %81 : vector<8x8xf32>
    %83 = math.exp %82 : vector<8x8xf32>
    %cst_20 = arith.constant dense<0.000000e+00> : vector<8xf32>
    %84 = vector.multi_reduction <add>, %83, %cst_20 [0] : vector<8x8xf32> to vector<8xf32>
    %85 = vector.shape_cast %84 : vector<8xf32> to vector<1x8xf32>
    %86 = vector.broadcast %80 : vector<1x8xf32> to vector<8x8xf32>
    %87 = arith.subf %36, %86 : vector<8x8xf32>
    %88 = math.exp %87 : vector<8x8xf32>
    %cst_21 = arith.constant 0.000000e+00 : f32
    %89 = vector.broadcast %cst_21 : f32 to vector<8x8xf32>
    %90 = arith.select %39, %88, %89 : vector<8x8xi1>, vector<8x8xf32>
    %cst_22 = arith.constant dense<0.000000e+00> : vector<8xf32>
    %91 = vector.multi_reduction <add>, %90, %cst_22 [0] : vector<8x8xf32> to vector<8xf32>
    %92 = vector.shape_cast %91 : vector<8xf32> to vector<1x8xf32>
    %93 = arith.addf %85, %92 : vector<1x8xf32>
    %94 = math.log %75 : vector<8x1xf32>
    %95 = arith.addf %62, %94 : vector<8x1xf32>
    %cst_23 = arith.constant dense<0.000000e+00> : vector<8xf32>
    %96 = vector.multi_reduction <add>, %95, %cst_23 [1] : vector<8x1xf32> to vector<8xf32>
    %97 = vector.shape_cast %96 : vector<8xf32> to vector<8x1xf32>
    %cst_24 = arith.constant dense<0.000000e+00> : vector<1xf32>
    %98 = vector.multi_reduction <add>, %97, %cst_24 [0] : vector<8x1xf32> to vector<1xf32>
    %99 = vector.shape_cast %98 : vector<1xf32> to vector<1x1xf32>
    %100 = arith.subf %57, %99 : vector<1x1xf32>
    %101 = math.log %93 : vector<1x8xf32>
    %102 = arith.addf %80, %101 : vector<1x8xf32>
    %cst_25 = arith.constant dense<0.000000e+00> : vector<1xf32>
    %103 = vector.multi_reduction <add>, %102, %cst_25 [1] : vector<1x8xf32> to vector<1xf32>
    %104 = vector.shape_cast %103 : vector<1xf32> to vector<1x1xf32>
    %cst_26 = arith.constant dense<0.000000e+00> : vector<1xf32>
    %105 = vector.multi_reduction <add>, %104, %cst_26 [0] : vector<1x1xf32> to vector<1xf32>
    %106 = vector.shape_cast %105 : vector<1xf32> to vector<1x1xf32>
    %107 = arith.subf %100, %106 : vector<1x1xf32>
    %108 = arith.addf %40, %107 : vector<1x1xf32>
    %109 = vector.extract_strided_slice %2 {offsets = [8, 0], sizes = [8, 128], strides = [1, 1]} : vector<16x128xbf16> to vector<8x128xbf16>
    %110 = arith.extf %109 : vector<8x128xbf16> to vector<8x128xf32>
    %111 = vector.extract_strided_slice %3 {offsets = [0, 0], sizes = [8, 128], strides = [1, 1]} : vector<16x128xbf16> to vector<8x128xbf16>
    %112 = arith.extf %111 : vector<8x128xbf16> to vector<8x128xf32>
    %113 = vector.extract_strided_slice %8 {offsets = [8, 0], sizes = [8, 8], strides = [1, 1]} : vector<16x16xf32> to vector<8x8xf32>
    %114 = arith.mulf %110, %112 : vector<8x128xf32>
    %cst_27 = arith.constant dense<0.000000e+00> : vector<8xf32>
    %115 = vector.multi_reduction <add>, %114, %cst_27 [1] : vector<8x128xf32> to vector<8xf32>
    %116 = vector.shape_cast %115 : vector<8xf32> to vector<8x1xf32>
    %cst_28 = arith.constant dense<0.000000e+00> : vector<1xf32>
    %117 = vector.multi_reduction <add>, %116, %cst_28 [0] : vector<8x1xf32> to vector<1xf32>
    %118 = vector.shape_cast %117 : vector<1xf32> to vector<1x1xf32>
    %119 = vector.broadcast %0 : f32 to vector<1x1xf32>
    %120 = arith.mulf %119, %118 : vector<1x1xf32>
    %cst_29 = arith.constant 8.000000e+00 : f32
    %121 = arith.mulf %cst_29, %1 : f32
    %122 = vector.broadcast %121 : f32 to vector<1x1xf32>
    %123 = arith.addf %120, %122 : vector<1x1xf32>
    %cst_30 = arith.constant 2.000000e+00 : f32
    %124 = vector.broadcast %cst_30 : f32 to vector<1x1xf32>
    %125 = arith.mulf %124, %123 : vector<1x1xf32>
    %cst_31 = arith.constant dense<0xFF800000> : vector<8xf32>
    %126 = vector.multi_reduction <maximumf>, %22, %cst_31 [1] : vector<8x8xf32> to vector<8xf32>
    %127 = vector.shape_cast %126 : vector<8xf32> to vector<8x1xf32>
    %cst_32 = arith.constant dense<0xFF800000> : vector<8xf32>
    %128 = vector.multi_reduction <maximumf>, %113, %cst_32 [1] : vector<8x8xf32> to vector<8xf32>
    %129 = vector.shape_cast %128 : vector<8xf32> to vector<8x1xf32>
    %130 = arith.maximumf %127, %129 : vector<8x1xf32>
    %131 = vector.broadcast %130 : vector<8x1xf32> to vector<8x8xf32>
    %132 = arith.subf %22, %131 : vector<8x8xf32>
    %133 = math.exp %132 : vector<8x8xf32>
    %cst_33 = arith.constant 0.000000e+00 : f32
    %134 = vector.broadcast %cst_33 : f32 to vector<8x8xf32>
    %135 = arith.select %39, %133, %134 : vector<8x8xi1>, vector<8x8xf32>
    %cst_34 = arith.constant dense<0.000000e+00> : vector<8xf32>
    %136 = vector.multi_reduction <add>, %135, %cst_34 [1] : vector<8x8xf32> to vector<8xf32>
    %137 = vector.shape_cast %136 : vector<8xf32> to vector<8x1xf32>
    %138 = vector.broadcast %130 : vector<8x1xf32> to vector<8x8xf32>
    %139 = arith.subf %113, %138 : vector<8x8xf32>
    %140 = math.exp %139 : vector<8x8xf32>
    %cst_35 = arith.constant dense<0.000000e+00> : vector<8xf32>
    %141 = vector.multi_reduction <add>, %140, %cst_35 [1] : vector<8x8xf32> to vector<8xf32>
    %142 = vector.shape_cast %141 : vector<8xf32> to vector<8x1xf32>
    %143 = arith.addf %137, %142 : vector<8x1xf32>
    %cst_36 = arith.constant dense<0xFF800000> : vector<8xf32>
    %144 = vector.multi_reduction <maximumf>, %113, %cst_36 [0] : vector<8x8xf32> to vector<8xf32>
    %145 = vector.shape_cast %144 : vector<8xf32> to vector<1x8xf32>
    %cst_37 = arith.constant dense<0xFF800000> : vector<8xf32>
    %146 = vector.multi_reduction <maximumf>, %29, %cst_37 [0] : vector<8x8xf32> to vector<8xf32>
    %147 = vector.shape_cast %146 : vector<8xf32> to vector<1x8xf32>
    %148 = arith.maximumf %145, %147 : vector<1x8xf32>
    %149 = vector.broadcast %148 : vector<1x8xf32> to vector<8x8xf32>
    %150 = arith.subf %113, %149 : vector<8x8xf32>
    %151 = math.exp %150 : vector<8x8xf32>
    %cst_38 = arith.constant dense<0.000000e+00> : vector<8xf32>
    %152 = vector.multi_reduction <add>, %151, %cst_38 [0] : vector<8x8xf32> to vector<8xf32>
    %153 = vector.shape_cast %152 : vector<8xf32> to vector<1x8xf32>
    %154 = vector.broadcast %148 : vector<1x8xf32> to vector<8x8xf32>
    %155 = arith.subf %29, %154 : vector<8x8xf32>
    %156 = math.exp %155 : vector<8x8xf32>
    %cst_39 = arith.constant 0.000000e+00 : f32
    %157 = vector.broadcast %cst_39 : f32 to vector<8x8xf32>
    %158 = arith.select %39, %156, %157 : vector<8x8xi1>, vector<8x8xf32>
    %cst_40 = arith.constant dense<0.000000e+00> : vector<8xf32>
    %159 = vector.multi_reduction <add>, %158, %cst_40 [0] : vector<8x8xf32> to vector<8xf32>
    %160 = vector.shape_cast %159 : vector<8xf32> to vector<1x8xf32>
    %161 = arith.addf %153, %160 : vector<1x8xf32>
    %162 = math.log %143 : vector<8x1xf32>
    %163 = arith.addf %130, %162 : vector<8x1xf32>
    %cst_41 = arith.constant dense<0.000000e+00> : vector<8xf32>
    %164 = vector.multi_reduction <add>, %163, %cst_41 [1] : vector<8x1xf32> to vector<8xf32>
    %165 = vector.shape_cast %164 : vector<8xf32> to vector<8x1xf32>
    %cst_42 = arith.constant dense<0.000000e+00> : vector<1xf32>
    %166 = vector.multi_reduction <add>, %165, %cst_42 [0] : vector<8x1xf32> to vector<1xf32>
    %167 = vector.shape_cast %166 : vector<1xf32> to vector<1x1xf32>
    %168 = arith.subf %125, %167 : vector<1x1xf32>
    %169 = math.log %161 : vector<1x8xf32>
    %170 = arith.addf %148, %169 : vector<1x8xf32>
    %cst_43 = arith.constant dense<0.000000e+00> : vector<1xf32>
    %171 = vector.multi_reduction <add>, %170, %cst_43 [1] : vector<1x8xf32> to vector<1xf32>
    %172 = vector.shape_cast %171 : vector<1xf32> to vector<1x1xf32>
    %cst_44 = arith.constant dense<0.000000e+00> : vector<1xf32>
    %173 = vector.multi_reduction <add>, %172, %cst_44 [0] : vector<1x1xf32> to vector<1xf32>
    %174 = vector.shape_cast %173 : vector<1xf32> to vector<1x1xf32>
    %175 = arith.subf %168, %174 : vector<1x1xf32>
    %176 = arith.addf %108, %175 : vector<1x1xf32>
    %cst_45 = arith.constant -0.446428567 : f32
    %177 = vector.broadcast %cst_45 : f32 to vector<1x1xf32>
    %178 = arith.mulf %177, %176 : vector<1x1xf32>
    %179 = vector.shape_cast %178 : vector<1x1xf32> to vector<1x1xf32>
    %180 = vector.broadcast %179 : vector<1x1xf32> to vector<1x128xf32>
    %c0_46 = arith.constant 0 : index
    %c0_47 = arith.constant 0 : index
    %181 = vector.load %arg3[%c0_46, %c0_47] : memref<1x128xf32, #tpu.memory_space<vmem>>, vector<1x128xf32>
    tpu.vector_store %arg3[%c0_46, %c0_47], %180 {strides = array<i32>} : memref<1x128xf32, #tpu.memory_space<vmem>>, vector<1x128xf32>,
    return
  }
}

</mosaic_0001>

<llo_original>
// kernel: tpu_custom_call.1
$region0: #{tpu_custom_call.1}
  #allocation0 [shape = 'u32[]', space=smem, size = 0x4, offset = 0x4, fixed_abs, tag = 'smem constant byte address 0x4 - core index']
  #allocation1 [shape = 'u32[144,128]{1,0:T(1,128)}', space=vmem, size = 0x12000, scoped, tag = 'internal scratch']
  %s0 = inlined_call_operand.hbm [shape: f32[2], index: 0, kind: input, shape index: {}]
  %s1 = inlined_call_operand.hbm [shape: bf16[16,128], index: 1, kind: input, shape index: {}]
  %s2 = inlined_call_operand.hbm [shape: bf16[16,128], index: 2, kind: input, shape index: {}]
  %s3 = inlined_call_operand.hbm [shape: f32[1,128], index: 3, kind: output, shape index: {}]
  %s4 = sld [smem:[#allocation0]]
  $region34: #{tpu_custom_call.1} parent=0
    _
  %s6 = ssub.s32 1, %s4
  %s7 = scalar_select 0, %s6, %s4
  $region1: #{tpu_custom_call.1} parent=0
    #allocation2 [shape = 'u8[512]{0}', space=smem, size = 0x200, scoped, tag = 'input window, operand 0, single buffered']
    #allocation3 [shape = 's32[1]{0}', space=sflag, size = 0x4, scoped, tag = 'scoped memory for tpu_custom_call.1']
    #allocation4 [shape = 's32[1]{0}', space=sflag, size = 0x4, scoped, tag = 'scoped memory for tpu_custom_call.1']
    #allocation5 [shape = 's32[1]{0}', space=sflag, size = 0x4, scoped, tag = 'scoped memory for tpu_custom_call.1']
    #allocation6 [shape = 'u8[4096]{0}', space=vmem, size = 0x1000, scoped, tag = 'input window, operand 1, single buffered']
    #allocation7 [shape = 'u8[4096]{0}', space=vmem, size = 0x1000, scoped, tag = 'input window, operand 2, single buffered']
    #allocation8 [shape = 's32[1]{0}', space=sflag, size = 0x4, scoped, tag = 'scoped memory for tpu_custom_call.1']
    #allocation9 [shape = 'u8[512]{0}', space=vmem, size = 0x400, scoped, tag = 'output window, operand 0, single buffered']
    %8 = vsyncpa [#allocation5], 0
    %9 = vsyncpa [#allocation3], 0
    %10 = vsyncpa [#allocation8], 0
    %11 = vsyncpa [#allocation4], 0
    // Predicated region
    $region2: #{tpu_custom_call.1} parent=1 // pred_check
      _
    $region3: #{tpu_custom_call.1} parent=1 // pred_check_branch
      %13 = sbr.rel (0) target = $region5
    $region4: #{tpu_custom_call.1} parent=1 // pred_region
      %s15 = ssub.s32 16, 16
      %16 = vsyncadd [#allocation5], %s15
      %19 = dma.hbm_to_smem %s0, 16, [#allocation2], [#allocation5]
    $region5: #{tpu_custom_call.1} parent=1 // pred_fallthru
      _
    // Predicated region
    $region6: #{tpu_custom_call.1} parent=1 // pred_check
      _
    $region7: #{tpu_custom_call.1} parent=1 // pred_check_branch
      %21 = sbr.rel (0) target = $region9
    $region8: #{tpu_custom_call.1} parent=1 // pred_region
      %s23 = ssub.s32 128, 128
      %24 = vsyncadd [#allocation3], %s23
      %s25 = sshll.u32 [#allocation6], 4
      %s26 = int_to_ptr.vmem [resolvable:$true] %s25
      %31 = dma.hbm_to_vmem [thread:$0]  %s1, 128, %s26, [#allocation3], 64, 64, 4
    $region9: #{tpu_custom_call.1} parent=1 // pred_fallthru
      _
    // Predicated region
    $region10: #{tpu_custom_call.1} parent=1 // pred_check
      _
    $region11: #{tpu_custom_call.1} parent=1 // pred_check_branch
      %33 = sbr.rel (0) target = $region13
    $region12: #{tpu_custom_call.1} parent=1 // pred_region
      %s35 = ssub.s32 128, 128
      %36 = vsyncadd [#allocation8], %s35
      %s37 = sshll.u32 [#allocation7], 4
      %s38 = int_to_ptr.vmem [resolvable:$true] %s37
      %43 = dma.hbm_to_vmem [thread:$0]  %s2, 128, %s38, [#allocation8], 64, 64, 4
    $region13: #{tpu_custom_call.1} parent=1 // pred_fallthru
      _
    // Predicated region
    $region14: #{tpu_custom_call.1} parent=1 // pred_check
      _
    $region15: #{tpu_custom_call.1} parent=1 // pred_check_branch
      %45 = sbr.rel (0) target = $region17
    $region16: #{tpu_custom_call.1} parent=1 // pred_region
      %46 = dma.done [#allocation5], 16
    $region17: #{tpu_custom_call.1} parent=1 // pred_fallthru
      _
    // Predicated region
    $region18: #{tpu_custom_call.1} parent=1 // pred_check
      _
    $region19: #{tpu_custom_call.1} parent=1 // pred_check_branch
      %48 = sbr.rel (0) target = $region21
    $region20: #{tpu_custom_call.1} parent=1 // pred_region
      %49 = dma.done [#allocation3], 128
    $region21: #{tpu_custom_call.1} parent=1 // pred_fallthru
      _
    // Predicated region
    $region22: #{tpu_custom_call.1} parent=1 // pred_check
      _
    $region23: #{tpu_custom_call.1} parent=1 // pred_check_branch
      %51 = sbr.rel (0) target = $region25
    $region24: #{tpu_custom_call.1} parent=1 // pred_region
      %52 = dma.done [#allocation8], 128
    $region25: #{tpu_custom_call.1} parent=1 // pred_fallthru
      _
    %53 = sfence
    %s55 = sld [smem:[#allocation2]]
    %s56 = sld [smem:[#allocation2 + $0x1]]
    %v57 = vld [vmem:[#allocation6] sm:$0xf]
    %v58 = vld [vmem:[#allocation6 + $0x4] sm:$0xf]
    %v59 = vld [vmem:[#allocation7] sm:$0xf]
    %v60 = vld [vmem:[#allocation7 + $0x4] sm:$0xf]
    %v63 = vunpack.c.l.b16 %v57
    %v64 = vunpack.c.l.b16 %v58
    %v65 = vpack.c.b16 %v64, %v63
    %v69 = vunpack.c.l.b16 %v59
    %v70 = vunpack.c.l.b16 %v60
    %v71 = vpack.c.b16 %v70, %v69
    %73 = vmatprep.subr.bf16.mxu0 0
    %74 = vmatpush1.bf16.xpose.msra.mxu0 %v71
    %75 = vmatprep.subr.bf16.mxu0 0
    %76 = vmatpush1.bf16.xpose.msra.mxu0 0
    %77 = vmatprep.subr.bf16.mxu0 0
    %78 = vmatpush1.bf16.xpose.msra.mxu0 0
    %79 = vmatprep.subr.bf16.mxu0 0
    %80 = vmatpush1.bf16.xpose.msra.mxu0 0
    %81 = vmatprep.subr.bf16.mxu0 0
    %82 = vmatpush1.bf16.xpose.msra.mxu0 0
    %83 = vmatprep.subr.bf16.mxu0 0
    %84 = vmatpush1.bf16.xpose.msra.mxu0 0
    %85 = vmatprep.subr.bf16.mxu0 0
    %86 = vmatpush1.bf16.xpose.msra.mxu0 0
    %87 = vmatprep.subr.bf16.mxu0 0
    %88 = vmatpush1.bf16.xpose.msra.mxu0 0
    %89 = vmatprep.subr.bf16.mxu0 0
    %90 = vmatpush1.bf16.xpose.msra.mxu0 0
    %91 = vmatprep.subr.bf16.mxu0 0
    %92 = vmatpush1.bf16.xpose.msra.mxu0 0
    %93 = vmatprep.subr.bf16.mxu0 0
    %94 = vmatpush1.bf16.xpose.msra.mxu0 0
    %95 = vmatprep.subr.bf16.mxu0 0
    %96 = vmatpush1.bf16.xpose.msra.mxu0 0
    %97 = vmatprep.subr.bf16.mxu0 0
    %98 = vmatpush1.bf16.xpose.msra.mxu0 0
    %99 = vmatprep.subr.bf16.mxu0 0
    %100 = vmatpush1.bf16.xpose.msra.mxu0 0
    %101 = vmatprep.subr.bf16.mxu0 0
    %102 = vmatpush1.bf16.xpose.msra.mxu0 0
    %103 = vmatprep.subr.bf16.mxu0 0
    %104 = vmatpush1.bf16.xpose.msra.mxu0 0
    %105 = vmatprep.mubr.bf16.mxu0 0
    %106 = vmatmul.mubr.bf16.gmra.mrb[0].mxu0 %v65
    %v107 = vpop.f32.mrb[0].mxu0
    %v108 = vadd.f32 0.0, %v107
    %v109 = vpop.f32.mrb[0].mxu0
    %v110 = vpop.f32.mrb[0].mxu0
    %v111 = vadd.f32 0.0, %v110
    %v112 = vpop.f32.mrb[0].mxu0
    %113 = vdwg.mxu0
    %v114 = vstv %s55
    %v115 = vmul.f32 %v108, %v114
    %v116 = vmul.f32 %v111, %v114
    %v117 = vstv %s56
    %v118 = vadd.f32 %v115, %v117
    %v119 = vadd.f32 %v116, %v117
    %120 = vmatprep.subr.bf16.mxu0 0
    %121 = vmatpush1.bf16.xpose.msra.mxu0 %v57
    %122 = vmatprep.subr.bf16.mxu0 0
    %123 = vmatpush1.bf16.xpose.msra.mxu0 0
    %124 = vmatprep.subr.bf16.mxu0 0
    %125 = vmatpush1.bf16.xpose.msra.mxu0 0
    %126 = vmatprep.subr.bf16.mxu0 0
    %127 = vmatpush1.bf16.xpose.msra.mxu0 0
    %128 = vmatprep.subr.bf16.mxu0 0
    %129 = vmatpush1.bf16.xpose.msra.mxu0 0
    %130 = vmatprep.subr.bf16.mxu0 0
    %131 = vmatpush1.bf16.xpose.msra.mxu0 0
    %132 = vmatprep.subr.bf16.mxu0 0
    %133 = vmatpush1.bf16.xpose.msra.mxu0 0
    %134 = vmatprep.subr.bf16.mxu0 0
    %135 = vmatpush1.bf16.xpose.msra.mxu0 0
    %136 = vmatprep.subr.bf16.mxu0 0
    %137 = vmatpush1.bf16.xpose.msra.mxu0 0
    %138 = vmatprep.subr.bf16.mxu0 0
    %139 = vmatpush1.bf16.xpose.msra.mxu0 0
    %140 = vmatprep.subr.bf16.mxu0 0
    %141 = vmatpush1.bf16.xpose.msra.mxu0 0
    %142 = vmatprep.subr.bf16.mxu0 0
    %143 = vmatpush1.bf16.xpose.msra.mxu0 0
    %144 = vmatprep.subr.bf16.mxu0 0
    %145 = vmatpush1.bf16.xpose.msra.mxu0 0
    %146 = vmatprep.subr.bf16.mxu0 0
    %147 = vmatpush1.bf16.xpose.msra.mxu0 0
    %148 = vmatprep.subr.bf16.mxu0 0
    %149 = vmatpush1.bf16.xpose.msra.mxu0 0
    %150 = vmatprep.subr.bf16.mxu0 0
    %151 = vmatpush1.bf16.xpose.msra.mxu0 0
    %152 = vmatprep.mubr.bf16.mxu0 0
    %153 = vmatmul.mubr.bf16.gmra.mrb[0].mxu0 %v57
    %v154 = vpop.f32.mrb[0].mxu0
    %v155 = vadd.f32 0.0, %v154
    %v156 = vpop.f32.mrb[0].mxu0
    %v157 = vpop.f32.mrb[0].mxu0
    %v158 = vpop.f32.mrb[0].mxu0
    %159 = vdwg.mxu0
    %v160 = vmul.f32 %v155, %v114
    %v161 = vadd.f32 %v160, %v117
    %162 = vmatprep.subr.bf16.mxu0 0
    %163 = vmatpush1.bf16.xpose.msra.mxu0 %v58
    %164 = vmatprep.subr.bf16.mxu0 0
    %165 = vmatpush1.bf16.xpose.msra.mxu0 0
    %166 = vmatprep.subr.bf16.mxu0 0
    %167 = vmatpush1.bf16.xpose.msra.mxu0 0
    %168 = vmatprep.subr.bf16.mxu0 0
    %169 = vmatpush1.bf16.xpose.msra.mxu0 0
    %170 = vmatprep.subr.bf16.mxu0 0
    %171 = vmatpush1.bf16.xpose.msra.mxu0 0
    %172 = vmatprep.subr.bf16.mxu0 0
    %173 = vmatpush1.bf16.xpose.msra.mxu0 0
    %174 = vmatprep.subr.bf16.mxu0 0
    %175 = vmatpush1.bf16.xpose.msra.mxu0 0
    %176 = vmatprep.subr.bf16.mxu0 0
    %177 = vmatpush1.bf16.xpose.msra.mxu0 0
    %178 = vmatprep.subr.bf16.mxu0 0
    %179 = vmatpush1.bf16.xpose.msra.mxu0 0
    %180 = vmatprep.subr.bf16.mxu0 0
    %181 = vmatpush1.bf16.xpose.msra.mxu0 0
    %182 = vmatprep.subr.bf16.mxu0 0
    %183 = vmatpush1.bf16.xpose.msra.mxu0 0
    %184 = vmatprep.subr.bf16.mxu0 0
    %185 = vmatpush1.bf16.xpose.msra.mxu0 0
    %186 = vmatprep.subr.bf16.mxu0 0
    %187 = vmatpush1.bf16.xpose.msra.mxu0 0
    %188 = vmatprep.subr.bf16.mxu0 0
    %189 = vmatpush1.bf16.xpose.msra.mxu0 0
    %190 = vmatprep.subr.bf16.mxu0 0
    %191 = vmatpush1.bf16.xpose.msra.mxu0 0
    %192 = vmatprep.subr.bf16.mxu0 0
    %193 = vmatpush1.bf16.xpose.msra.mxu0 0
    %194 = vmatprep.mubr.bf16.mxu0 0
    %195 = vmatmul.mubr.bf16.gmra.mrb[0].mxu0 %v58
    %v196 = vpop.f32.mrb[0].mxu0
    %v197 = vadd.f32 0.0, %v196
    %v198 = vpop.f32.mrb[0].mxu0
    %v199 = vpop.f32.mrb[0].mxu0
    %v200 = vpop.f32.mrb[0].mxu0
    %201 = vdwg.mxu0
    %v202 = vmul.f32 %v197, %v114
    %v203 = vadd.f32 %v202, %v117
    %204 = vmatprep.subr.bf16.mxu0 0
    %205 = vmatpush1.bf16.xpose.msra.mxu0 %v59
    %206 = vmatprep.subr.bf16.mxu0 0
    %207 = vmatpush1.bf16.xpose.msra.mxu0 0
    %208 = vmatprep.subr.bf16.mxu0 0
    %209 = vmatpush1.bf16.xpose.msra.mxu0 0
    %210 = vmatprep.subr.bf16.mxu0 0
    %211 = vmatpush1.bf16.xpose.msra.mxu0 0
    %212 = vmatprep.subr.bf16.mxu0 0
    %213 = vmatpush1.bf16.xpose.msra.mxu0 0
    %214 = vmatprep.subr.bf16.mxu0 0
    %215 = vmatpush1.bf16.xpose.msra.mxu0 0
    %216 = vmatprep.subr.bf16.mxu0 0
    %217 = vmatpush1.bf16.xpose.msra.mxu0 0
    %218 = vmatprep.subr.bf16.mxu0 0
    %219 = vmatpush1.bf16.xpose.msra.mxu0 0
    %220 = vmatprep.subr.bf16.mxu0 0
    %221 = vmatpush1.bf16.xpose.msra.mxu0 0
    %222 = vmatprep.subr.bf16.mxu0 0
    %223 = vmatpush1.bf16.xpose.msra.mxu0 0
    %224 = vmatprep.subr.bf16.mxu0 0
    %225 = vmatpush1.bf16.xpose.msra.mxu0 0
    %226 = vmatprep.subr.bf16.mxu0 0
    %227 = vmatpush1.bf16.xpose.msra.mxu0 0
    %228 = vmatprep.subr.bf16.mxu0 0
    %229 = vmatpush1.bf16.xpose.msra.mxu0 0
    %230 = vmatprep.subr.bf16.mxu0 0
    %231 = vmatpush1.bf16.xpose.msra.mxu0 0
    %232 = vmatprep.subr.bf16.mxu0 0
    %233 = vmatpush1.bf16.xpose.msra.mxu0 0
    %234 = vmatprep.subr.bf16.mxu0 0
    %235 = vmatpush1.bf16.xpose.msra.mxu0 0
    %236 = vmatprep.mubr.bf16.mxu0 0
    %237 = vmatmul.mubr.bf16.gmra.mrb[0].mxu0 %v59
    %v238 = vpop.f32.mrb[0].mxu0
    %v239 = vadd.f32 0.0, %v238
    %v240 = vpop.f32.mrb[0].mxu0
    %v241 = vpop.f32.mrb[0].mxu0
    %v242 = vpop.f32.mrb[0].mxu0
    %243 = vdwg.mxu0
    %v244 = vmul.f32 %v239, %v114
    %v245 = vadd.f32 %v244, %v117
    %246 = vmatprep.subr.bf16.mxu0 0
    %247 = vmatpush1.bf16.xpose.msra.mxu0 %v60
    %248 = vmatprep.subr.bf16.mxu0 0
    %249 = vmatpush1.bf16.xpose.msra.mxu0 0
    %250 = vmatprep.subr.bf16.mxu0 0
    %251 = vmatpush1.bf16.xpose.msra.mxu0 0
    %252 = vmatprep.subr.bf16.mxu0 0
    %253 = vmatpush1.bf16.xpose.msra.mxu0 0
    %254 = vmatprep.subr.bf16.mxu0 0
    %255 = vmatpush1.bf16.xpose.msra.mxu0 0
    %256 = vmatprep.subr.bf16.mxu0 0
    %257 = vmatpush1.bf16.xpose.msra.mxu0 0
    %258 = vmatprep.subr.bf16.mxu0 0
    %259 = vmatpush1.bf16.xpose.msra.mxu0 0
    %260 = vmatprep.subr.bf16.mxu0 0
    %261 = vmatpush1.bf16.xpose.msra.mxu0 0
    %262 = vmatprep.subr.bf16.mxu0 0
    %263 = vmatpush1.bf16.xpose.msra.mxu0 0
    %264 = vmatprep.subr.bf16.mxu0 0
    %265 = vmatpush1.bf16.xpose.msra.mxu0 0
    %266 = vmatprep.subr.bf16.mxu0 0
    %267 = vmatpush1.bf16.xpose.msra.mxu0 0
    %268 = vmatprep.subr.bf16.mxu0 0
    %269 = vmatpush1.bf16.xpose.msra.mxu0 0
    %270 = vmatprep.subr.bf16.mxu0 0
    %271 = vmatpush1.bf16.xpose.msra.mxu0 0
    %272 = vmatprep.subr.bf16.mxu0 0
    %273 = vmatpush1.bf16.xpose.msra.mxu0 0
    %274 = vmatprep.subr.bf16.mxu0 0
    %275 = vmatpush1.bf16.xpose.msra.mxu0 0
    %276 = vmatprep.subr.bf16.mxu0 0
    %277 = vmatpush1.bf16.xpose.msra.mxu0 0
    %278 = vmatprep.mubr.bf16.mxu0 0
    %279 = vmatmul.mubr.bf16.gmra.mrb[0].mxu0 %v60
    %v280 = vpop.f32.mrb[0].mxu0
    %v281 = vadd.f32 0.0, %v280
    %v282 = vpop.f32.mrb[0].mxu0
    %v283 = vpop.f32.mrb[0].mxu0
    %v284 = vpop.f32.mrb[0].mxu0
    %285 = vdwg.mxu0
    %v286 = vmul.f32 %v281, %v114
    %v287 = vadd.f32 %v286, %v117
    %v288 = vlaneseq
    %v289 = vshrl.u32 %v288, 7
    %v290 = vlaneseq
    %v291 = vand.u32 %v290, 127
    %vm292 = vcmp.ne.s32.totalorder %v289, %v291
    %v293 = vunpack.c.l.bf16 %v57
    %v294 = vunpack.c.l.bf16 %v60
    %v295 = vmul.f32 %v293, %v294
    %296 = vadd.xlane.f32.xlu0 %v295
    %v297 = vpop.xlane.xlu0 %296
    %v298 = vrot.slane %v297, 4
    %v299 = vadd.f32 %v297, %v298
    %v300 = vrot.slane %v299, 2
    %v301 = vadd.f32 %v299, %v300
    %v302 = vrot.slane %v301, 1
    %v303 = vadd.f32 %v301, %v302
    %v304 = vmul.f32 %v114, %v303
    %s305 = smul.f32 %s56, 8.0
    %v306 = vstv %s305
    %v307 = vadd.f32 %v304, %v306
    %v308 = vmul.f32 %v307, 2.0
    %vm309 = vcmask 64512
    %v310 = vsel %vm309, %v161, -inf
    %311 = vmax.xlane.f32.xlu0 %v310
    %v312 = vpop.xlane.xlu0 %311
    %vm313 = vcmask 130112
    %v314 = vsel %vm313, %v118, -inf
    %315 = vmax.xlane.f32.xlu0 %v314
    %v316 = vpop.xlane.xlu0 %315
    %v317 = vmax.f32 %v312, %v316
    %v318 = vsub.f32 %v161, %v317
    %v319 = vmul.f32 %v318, 1.442695
    %v320 = vpow.pop %v319
    %v321 = vsel %vm292, %v320, 0.0
    %v322 = vsel %vm309, %v321, 0.0
    %323 = vadd.xlane.f32.xlu0 %v322
    %v324 = vpop.xlane.xlu0 %323
    %v325 = vsub.f32 %v118, %v317
    %v326 = vmul.f32 %v325, 1.442695
    %v327 = vpow.pop %v326
    %329 = vrot.lane.b32.xlu0 %v327, 120
    %v330 = vpop.permute.xlu0 %329
    %v332 = vsel %vm309, %v330, 0.0
    %333 = vadd.xlane.f32.xlu0 %v332
    %v334 = vpop.xlane.xlu0 %333
    %v335 = vadd.f32 %v324, %v334
    %v336 = vrot.slane %v314, 4
    %v337 = vmax.f32 %v314, %v336
    %v338 = vrot.slane %v337, 2
    %v339 = vmax.f32 %v337, %v338
    %v340 = vrot.slane %v339, 1
    %v341 = vmax.f32 %v339, %v340
    %v342 = vsel %vm309, %v287, -inf
    %v343 = vrot.slane %v342, 4
    %v344 = vmax.f32 %v342, %v343
    %v345 = vrot.slane %v344, 2
    %v346 = vmax.f32 %v344, %v345
    %v347 = vrot.slane %v346, 1
    %v348 = vmax.f32 %v346, %v347
    %350 = vrot.lane.b32.xlu0 %v348, 8
    %v351 = vpop.permute.xlu0 %350
    %v353 = vmax.f32 %v341, %v351
    %v354 = vlaneseq
    %v355 = vshrl.u32 %v354, 7
    %v356 = vsub.s32 0, %v355
    %v357 = vrot.slane %v353, %v356
    %v358 = vsub.f32 %v118, %v357
    %v359 = vmul.f32 %v358, 1.442695
    %v360 = vpow.pop %v359
    %v361 = vsel %vm313, %v360, 0.0
    %v362 = vrot.slane %v361, 4
    %v363 = vadd.f32 %v361, %v362
    %v364 = vrot.slane %v363, 2
    %v365 = vadd.f32 %v363, %v364
    %v366 = vrot.slane %v365, 1
    %v367 = vadd.f32 %v365, %v366
    %369 = vrot.lane.b32.xlu0 %v357, 120
    %v370 = vpop.permute.xlu0 %369
    %v372 = vsub.f32 %v287, %v370
    %v373 = vmul.f32 %v372, 1.442695
    %v374 = vpow.pop %v373
    %v375 = vsel %vm292, %v374, 0.0
    %v376 = vsel %vm309, %v375, 0.0
    %v377 = vrot.slane %v376, 4
    %v378 = vadd.f32 %v376, %v377
    %v379 = vrot.slane %v378, 2
    %v380 = vadd.f32 %v378, %v379
    %v381 = vrot.slane %v380, 1
    %v382 = vadd.f32 %v380, %v381
    %384 = vrot.lane.b32.xlu0 %v382, 8
    %v385 = vpop.permute.xlu0 %384
    %v387 = vadd.f32 %v367, %v385
    %v388 = vlog2.pop %v335
    %v389 = vmul.f32 %v388, 0.6931472
    %v390 = vadd.f32 %v317, %v389
    %v391 = vadd.f32 %v390, 0.0
    %v392 = vrot.slane %v391, 4
    %v393 = vadd.f32 %v391, %v392
    %v394 = vrot.slane %v393, 2
    %v395 = vadd.f32 %v393, %v394
    %v396 = vrot.slane %v395, 1
    %v397 = vadd.f32 %v395, %v396
    %v398 = vsub.f32 %v308, %v397
    %v399 = vlog2.pop %v387
    %v400 = vmul.f32 %v399, 0.6931472
    %v401 = vadd.f32 %v353, %v400
    %403 = vrot.lane.b32.xlu0 %v401, 120
    %v404 = vpop.permute.xlu0 %403
    %vm406 = vcmask 57344
    %v407 = vsel %vm406, %v404, 0.0
    %408 = vadd.xlane.f32.xlu0 %v407
    %v409 = vpop.xlane.xlu0 %408
    %v410 = vadd.f32 %v409, 0.0
    %v411 = vsub.f32 %v398, %v410
    %v412 = vadd.f32 %v411, 0.0
    %v413 = vunpack.c.l.bf16 %v58
    %v414 = vunpack.c.l.bf16 %v59
    %v415 = vmul.f32 %v413, %v414
    %416 = vadd.xlane.f32.xlu0 %v415
    %v417 = vpop.xlane.xlu0 %416
    %v418 = vrot.slane %v417, 4
    %v419 = vadd.f32 %v417, %v418
    %v420 = vrot.slane %v419, 2
    %v421 = vadd.f32 %v419, %v420
    %v422 = vrot.slane %v421, 1
    %v423 = vadd.f32 %v421, %v422
    %v424 = vmul.f32 %v114, %v423
    %v425 = vadd.f32 %v424, %v306
    %v426 = vmul.f32 %v425, 2.0
    %v427 = vsel %vm309, %v203, -inf
    %428 = vmax.xlane.f32.xlu0 %v427
    %v429 = vpop.xlane.xlu0 %428
    %v430 = vsel %vm309, %v119, -inf
    %431 = vmax.xlane.f32.xlu0 %v430
    %v432 = vpop.xlane.xlu0 %431
    %v433 = vmax.f32 %v429, %v432
    %v434 = vsub.f32 %v203, %v433
    %v435 = vmul.f32 %v434, 1.442695
    %v436 = vpow.pop %v435
    %v437 = vsel %vm292, %v436, 0.0
    %v438 = vsel %vm309, %v437, 0.0
    %439 = vadd.xlane.f32.xlu0 %v438
    %v440 = vpop.xlane.xlu0 %439
    %v441 = vsub.f32 %v119, %v433
    %v442 = vmul.f32 %v441, 1.442695
    %v443 = vpow.pop %v442
    %v444 = vsel %vm309, %v443, 0.0
    %445 = vadd.xlane.f32.xlu0 %v444
    %v446 = vpop.xlane.xlu0 %445
    %v447 = vadd.f32 %v440, %v446
    %v448 = vrot.slane %v430, 4
    %v449 = vmax.f32 %v430, %v448
    %v450 = vrot.slane %v449, 2
    %v451 = vmax.f32 %v449, %v450
    %v452 = vrot.slane %v451, 1
    %v453 = vmax.f32 %v451, %v452
    %v454 = vsel %vm309, %v245, -inf
    %v455 = vrot.slane %v454, 4
    %v456 = vmax.f32 %v454, %v455
    %v457 = vrot.slane %v456, 2
    %v458 = vmax.f32 %v456, %v457
    %v459 = vrot.slane %v458, 1
    %v460 = vmax.f32 %v458, %v459
    %v461 = vmax.f32 %v453, %v460
    %v462 = vsub.f32 %v119, %v461
    %v463 = vmul.f32 %v462, 1.442695
    %v464 = vpow.pop %v463
    %v465 = vsel %vm309, %v464, 0.0
    %v466 = vrot.slane %v465, 4
    %v467 = vadd.f32 %v465, %v466
    %v468 = vrot.slane %v467, 2
    %v469 = vadd.f32 %v467, %v468
    %v470 = vrot.slane %v469, 1
    %v471 = vadd.f32 %v469, %v470
    %v472 = vsub.f32 %v245, %v461
    %v473 = vmul.f32 %v472, 1.442695
    %v474 = vpow.pop %v473
    %v475 = vsel %vm292, %v474, 0.0
    %v476 = vsel %vm309, %v475, 0.0
    %v477 = vrot.slane %v476, 4
    %v478 = vadd.f32 %v476, %v477
    %v479 = vrot.slane %v478, 2
    %v480 = vadd.f32 %v478, %v479
    %v481 = vrot.slane %v480, 1
    %v482 = vadd.f32 %v480, %v481
    %v483 = vadd.f32 %v471, %v482
    %v484 = vlog2.pop %v447
    %v485 = vmul.f32 %v484, 0.6931472
    %v486 = vadd.f32 %v433, %v485
    %v487 = vadd.f32 %v486, 0.0
    %v488 = vrot.slane %v487, 4
    %v489 = vadd.f32 %v487, %v488
    %v490 = vrot.slane %v489, 2
    %v491 = vadd.f32 %v489, %v490
    %v492 = vrot.slane %v491, 1
    %v493 = vadd.f32 %v491, %v492
    %v494 = vsub.f32 %v426, %v493
    %v495 = vlog2.pop %v483
    %v496 = vmul.f32 %v495, 0.6931472
    %v497 = vadd.f32 %v461, %v496
    %v498 = vsel %vm309, %v497, 0.0
    %499 = vadd.xlane.f32.xlu0 %v498
    %v500 = vpop.xlane.xlu0 %499
    %v501 = vadd.f32 %v500, 0.0
    %v502 = vsub.f32 %v494, %v501
    %v503 = vadd.f32 %v412, %v502
    %v504 = vmul.f32 %v503, -0.44642857
    %505 = vst [vmem:[#allocation9] sm:$0x1] %v504
    // Predicated region
    $region26: #{tpu_custom_call.1} parent=1 // pred_check
      _
    $region27: #{tpu_custom_call.1} parent=1 // pred_check_branch
      %507 = sbr.rel (0) target = $region29
    $region28: #{tpu_custom_call.1} parent=1 // pred_region
      %s509 = ssub.s32 16, 16
      %510 = vsyncadd [#allocation4], %s509
      %s512 = sshll.u32 [#allocation9], 4
      %s513 = int_to_ptr.vmem [resolvable:$true] %s512
      %515 = dma.vmem_to_hbm [thread:$0]  %s513, 16, %s3, [#allocation4]
    $region29: #{tpu_custom_call.1} parent=1 // pred_fallthru
      _
    // Predicated region
    $region30: #{tpu_custom_call.1} parent=1 // pred_check
      _
    $region31: #{tpu_custom_call.1} parent=1 // pred_check_branch
      %517 = sbr.rel (0) target = $region33
    $region32: #{tpu_custom_call.1} parent=1 // pred_region
      %518 = dma.done [#allocation4], 16
    $region33: #{tpu_custom_call.1} parent=1 // pred_fallthru
      _
    %519 = vsyncpa [#allocation3], 1
    %520 = vsyncpa [#allocation8], 1
    %521 = vsyncpa [#allocation4], 1
    %522 = vsyncpa [#allocation5], 1

</llo_original>
